<compile_context>
chip_gen: v5e
topology: v5e:2x2
jax: 0.10.0
libtpu: 0.0.40
codegen_flags: <defaults>
</compile_context>

<pallas_src>
import functools

import jax
import jax.numpy as jnp
from jax.experimental import pallas as pl
from jax.experimental.pallas import tpu as pltpu


def _softplus(x):
    # matches torch.nn.Softplus(beta=1, threshold=20): identity above threshold
    return jnp.where(x > 20.0, x, jnp.log1p(jnp.exp(jnp.minimum(x, 20.0))))


def dre_kernel(x_ref, w1_ref, b1_ref, w2_ref, out_ref):
    x = x_ref[...].astype(jnp.float32)

    # Fused layer 1: (TB, size) @ (size, 2*hidden) + (1, 2*hidden)  -> ReLU
    h = jnp.dot(x, w1_ref[...], preferred_element_type=jnp.float32) + b1_ref[...]
    h = jnp.maximum(h, 0.0)

    # Fused block-diagonal layer 2: (TB, 2*hidden) @ (2*hidden, 2) -> both logits at once
    logits = jnp.dot(h, w2_ref[...], preferred_element_type=jnp.float32)

    # dclamp forward == plain clamp (custom backward is irrelevant for fwd), then softplus
    logits = jnp.clip(logits, -50.0, 50.0)
    out_ref[...] = _softplus(logits).astype(out_ref.dtype)


def _round_up(n, m):
    return ((n + m - 1) // m) * m


@functools.partial(jax.jit, static_argnames=("block_b",))
def dre_model(x, params, block_b=512):
    """x: (B, size) float32; params: (W1a, b1a, W2a, W1b, b1b, W2b)."""
    w1a, b1a, w2a, w1b, b1b, w2b = params
    size, hidden = w1a.shape

    # --- fuse the two branches (done once, outside the kernel) ---
    w1 = jnp.concatenate([w1a, w1b], axis=1)                    # (size, 2*hidden)
    b1 = jnp.concatenate([b1a, b1b], axis=1)                    # (1, 2*hidden)
    zeros = jnp.zeros_like(w2a)
    w2 = jnp.concatenate(                                       # block-diag (2*hidden, 2)
        [jnp.concatenate([w2a, zeros], axis=1),
         jnp.concatenate([zeros, w2b], axis=1)], axis=0)

    B = x.shape[0]
    tb = min(block_b, _round_up(B, 8))      # batch tile, multiple of 8 sublanes
    Bp = _round_up(B, tb)
    if Bp != B:
        x = jnp.pad(x, ((0, Bp - B), (0, 0)))

    grid = (Bp // tb,)
    out = pl.pallas_call(
        dre_kernel,
        out_shape=jax.ShapeDtypeStruct((Bp, 2), jnp.float32),
        grid=grid,
        in_specs=[
            pl.BlockSpec((tb, size), lambda i: (i, 0)),              # x: tiled over batch
            pl.BlockSpec((size, 2 * hidden), lambda i: (0, 0)),      # W1 fused: resident
            pl.BlockSpec((1, 2 * hidden), lambda i: (0, 0)),         # b1 fused: resident
            pl.BlockSpec((2 * hidden, 2), lambda i: (0, 0)),         # W2 block-diag: resident
        ],
        out_specs=pl.BlockSpec((tb, 2), lambda i: (i, 0)),
        compiler_params=pltpu.CompilerParams(
            dimension_semantics=("parallel",),
        ),
    )(x, w1, b1, w2)
    return out[:B]


def init_params(key, size):
    hidden = 2 * size
    k1, k2, k3, k4, k5, k6 = jax.random.split(key, 6)
    scale1 = 1.0 / jnp.sqrt(size)
    scale2 = 1.0 / jnp.sqrt(hidden)
    # model1: Linear(size, 2*size) with bias, Linear(2*size, 1) without bias
    w1a = jax.random.uniform(k1, (size, hidden), jnp.float32, -scale1, scale1)
    b1a = jax.random.uniform(k2, (1, hidden), jnp.float32, -scale1, scale1)
    w2a = jax.random.uniform(k3, (hidden, 1), jnp.float32, -scale2, scale2)
    # model2: same shapes
    w1b = jax.random.uniform(k4, (size, hidden), jnp.float32, -scale1, scale1)
    b1b = jax.random.uniform(k5, (1, hidden), jnp.float32, -scale1, scale1)
    w2b = jax.random.uniform(k6, (hidden, 1), jnp.float32, -scale2, scale2)
    return (w1a, b1a, w2a, w1b, b1b, w2b)


def dre_ref(x, params):
    w1a, b1a, w2a, w1b, b1b, w2b = params

    def mlp(w1, b1, w2):
        h = jnp.maximum(x @ w1 + b1, 0.0)
        return h @ w2

    l1 = _softplus(jnp.clip(mlp(w1a, b1a, w2a), -50.0, 50.0))
    l2 = _softplus(jnp.clip(mlp(w1b, b1b, w2b), -50.0, 50.0))
    return jnp.concatenate([l1, l2], axis=1)


if __name__ == "__main__":
    SIZE = 32   # DreModel(size=32)

    key = jax.random.PRNGKey(0)
    kx, kp, kx2 = jax.random.split(key, 3)
    params = init_params(kp, SIZE)

    # small batch (single grid step)
    x = jax.random.normal(kx, (8, SIZE), dtype=jnp.float32)
    out = jax.block_until_ready(dre_model(x, params))
    ref = dre_ref(x, params)
    assert out.shape == (8, 2), out.shape
    assert jnp.allclose(out, ref, atol=1e-5, rtol=1e-5)

    # larger, non-multiple batch (exercises the batch grid + padding path)
    x2 = jax.random.normal(kx2, (600, SIZE), dtype=jnp.float32)
    out2 = jax.block_until_ready(dre_model(x2, params))
    ref2 = dre_ref(x2, params)
    assert out2.shape == (600, 2), out2.shape
    assert jnp.allclose(out2, ref2, atol=1e-5, rtol=1e-5)

    print("KERNEL_OK")
</pallas_src>

<mosaic_0001>
module attributes {stable_mosaic.version = 11 : i64} {
  func.func @dre_kernel(%arg0: i32, %arg1: memref<8x32xf32, #tpu.memory_space<vmem>>, %arg2: memref<32x128xf32, #tpu.memory_space<vmem>>, %arg3: memref<1x128xf32, #tpu.memory_space<vmem>>, %arg4: memref<128x2xf32, #tpu.memory_space<vmem>>, %arg5: memref<8x2xf32, #tpu.memory_space<vmem>>) attributes {dimension_semantics = [#tpu.dimension_semantics<parallel>], iteration_bounds = array<i64: 1>, scalar_prefetch = 0 : i64, scratch_operands = 0 : i64, tpu.core_type = #tpu.core_type<tc>, window_params = [{transform_indices = @transform_0, window_bounds = array<i64: 8, 32>}, {pipeline_mode = #tpu.pipeline_mode<synchronous>, transform_indices = @transform_1, window_bounds = array<i64: 32, 128>}, {pipeline_mode = #tpu.pipeline_mode<synchronous>, transform_indices = @transform_2, window_bounds = array<i64: 1, 128>}, {pipeline_mode = #tpu.pipeline_mode<synchronous>, transform_indices = @transform_3, window_bounds = array<i64: 128, 2>}, {transform_indices = @transform_4, window_bounds = array<i64: 8, 2>}]} {
    %c0 = arith.constant 0 : index
    %c0_0 = arith.constant 0 : index
    %0 = vector.load %arg1[%c0, %c0_0] : memref<8x32xf32, #tpu.memory_space<vmem>>, vector<8x32xf32>
    %c0_1 = arith.constant 0 : index
    %c0_2 = arith.constant 0 : index
    %1 = vector.load %arg2[%c0_1, %c0_2] : memref<32x128xf32, #tpu.memory_space<vmem>>, vector<32x128xf32>
    %cst = arith.constant dense<0.000000e+00> : vector<8x128xf32>
    %2 = tpu.matmul %0, %1, %cst {dimension_numbers = #tpu.dot_dimension_numbers<[1], [0], [0], [1], [0, 0, 1, 1], [], []>} : vector<8x32xf32>, vector<32x128xf32>, vector<8x128xf32> -> vector<8x128xf32>
    %c0_3 = arith.constant 0 : index
    %c0_4 = arith.constant 0 : index
    %3 = vector.load %arg3[%c0_3, %c0_4] : memref<1x128xf32, #tpu.memory_space<vmem>>, vector<1x128xf32>
    %4 = vector.broadcast %3 : vector<1x128xf32> to vector<8x128xf32>
    %5 = arith.addf %2, %4 : vector<8x128xf32>
    %cst_5 = arith.constant 0.000000e+00 : f32
    %6 = vector.broadcast %cst_5 : f32 to vector<8x128xf32>
    %7 = arith.maximumf %5, %6 : vector<8x128xf32>
    %c0_6 = arith.constant 0 : index
    %c0_7 = arith.constant 0 : index
    %8 = vector.load %arg4[%c0_6, %c0_7] : memref<128x2xf32, #tpu.memory_space<vmem>>, vector<128x2xf32>
    %cst_8 = arith.constant dense<0.000000e+00> : vector<8x2xf32>
    %9 = tpu.matmul %7, %8, %cst_8 {dimension_numbers = #tpu.dot_dimension_numbers<[1], [0], [0], [1], [0, 0, 1, 1], [], []>} : vector<8x128xf32>, vector<128x2xf32>, vector<8x2xf32> -> vector<8x2xf32>
    %cst_9 = arith.constant -5.000000e+01 : f32
    %cst_10 = arith.constant 5.000000e+01 : f32
    %10 = vector.broadcast %cst_9 : f32 to vector<8x2xf32>
    %11 = arith.maximumf %10, %9 : vector<8x2xf32>
    %12 = vector.broadcast %cst_10 : f32 to vector<8x2xf32>
    %13 = arith.minimumf %12, %11 : vector<8x2xf32>
    %cst_11 = arith.constant 2.000000e+01 : f32
    %14 = vector.broadcast %cst_11 : f32 to vector<8x2xf32>
    %15 = arith.cmpf ogt, %13, %14 : vector<8x2xf32>
    %cst_12 = arith.constant 2.000000e+01 : f32
    %16 = vector.broadcast %cst_12 : f32 to vector<8x2xf32>
    %17 = arith.minimumf %13, %16 : vector<8x2xf32>
    %18 = math.exp %17 : vector<8x2xf32>
    %19 = math.log1p %18 : vector<8x2xf32>
    %20 = arith.select %15, %13, %19 : vector<8x2xi1>, vector<8x2xf32>
    %c0_13 = arith.constant 0 : index
    %c0_14 = arith.constant 0 : index
    %21 = vector.load %arg5[%c0_13, %c0_14] : memref<8x2xf32, #tpu.memory_space<vmem>>, vector<8x2xf32>
    tpu.vector_store %arg5[%c0_13, %c0_14], %20 {strides = array<i32>} : memref<8x2xf32, #tpu.memory_space<vmem>>, vector<8x2xf32>,
    return
  }
  func.func @transform_0(%arg0: i32) -> (i32, i32) {
    %c0_i32 = arith.constant 0 : i32
    %c0_i32_0 = arith.constant 0 : i32
    return %arg0, %c0_i32 : i32, i32
  }
  func.func @transform_1(%arg0: i32) -> (i32, i32) {
    %c0_i32 = arith.constant 0 : i32
    %c0_i32_0 = arith.constant 0 : i32
    %c0_i32_1 = arith.constant 0 : i32
    return %c0_i32, %c0_i32_0 : i32, i32
  }
  func.func @transform_2(%arg0: i32) -> (i32, i32) {
    %c0_i32 = arith.constant 0 : i32
    %c0_i32_0 = arith.constant 0 : i32
    %c0_i32_1 = arith.constant 0 : i32
    return %c0_i32, %c0_i32_0 : i32, i32
  }
  func.func @transform_3(%arg0: i32) -> (i32, i32) {
    %c0_i32 = arith.constant 0 : i32
    %c0_i32_0 = arith.constant 0 : i32
    %c0_i32_1 = arith.constant 0 : i32
    return %c0_i32, %c0_i32_0 : i32, i32
  }
  func.func @transform_4(%arg0: i32) -> (i32, i32) {
    %c0_i32 = arith.constant 0 : i32
    %c0_i32_0 = arith.constant 0 : i32
    return %arg0, %c0_i32 : i32, i32
  }
}

</mosaic_0001>

<llo_original>
// kernel: dre_model.1
$region0: #{dre_model.1}
  #allocation0 [shape = 'u32[]', space=smem, size = 0x4, offset = 0x4, fixed_abs, tag = 'smem constant byte address 0x4 - core index']
  #allocation1 [shape = 'u32[72,128]{1,0:T(1,128)}', space=vmem, size = 0x9000, scoped, tag = 'internal scratch']
  %s0 = inlined_call_operand.vmem [shape: f32[8,32], index: 0, kind: input, shape index: {}]
  %s1 = inlined_call_operand.vmem [shape: f32[32,128], index: 1, kind: input, shape index: {}]
  %s2 = inlined_call_operand.vmem [shape: f32[1,128], index: 2, kind: input, shape index: {}]
  %s3 = inlined_call_operand.vmem [shape: f32[128,2], index: 3, kind: input, shape index: {}]
  %s4 = inlined_call_operand.vmem [shape: f32[8,2], index: 4, kind: output, shape index: {}]
  %s5 = sld [smem:[#allocation0]]
  $region26: #{dre_model.1} parent=0
    _
  %s7 = ssub.s32 1, %s5
  %s8 = scalar_select 0, %s7, %s5
  // Predicated region
  $region2: #{dre_model.1} parent=0 // pred_check
    _
  $region3: #{dre_model.1} parent=0 // pred_check_branch
    %10 = sbr.rel (0) target = $region5
  $region4: #{dre_model.1} parent=0 // pred_region
    _
  $region5: #{dre_model.1} parent=0 // pred_fallthru
    _
  // Predicated region
  $region6: #{dre_model.1} parent=0 // pred_check
    _
  $region7: #{dre_model.1} parent=0 // pred_check_branch
    %12 = sbr.rel (0) target = $region9
  $region8: #{dre_model.1} parent=0 // pred_region
    _
  $region9: #{dre_model.1} parent=0 // pred_fallthru
    _
  // Predicated region
  $region10: #{dre_model.1} parent=0 // pred_check
    _
  $region11: #{dre_model.1} parent=0 // pred_check_branch
    %14 = sbr.rel (0) target = $region13
  $region12: #{dre_model.1} parent=0 // pred_region
    _
  $region13: #{dre_model.1} parent=0 // pred_fallthru
    _
  // Predicated region
  $region14: #{dre_model.1} parent=0 // pred_check
    _
  $region15: #{dre_model.1} parent=0 // pred_check_branch
    %16 = sbr.rel (0) target = $region17
  $region16: #{dre_model.1} parent=0 // pred_region
    _
  $region17: #{dre_model.1} parent=0 // pred_fallthru
    _
  %v17 = vld [vmem:[%s0] sm:$0xff]
  %v18 = vld [vmem:[%s1] sm:$0xff]
  %v19 = vld [vmem:[%s1 + $0x8] sm:$0xff]
  %v20 = vld [vmem:[%s1 + $0x10] sm:$0xff]
  %v21 = vld [vmem:[%s1 + $0x18] sm:$0xff]
  %v22 = vld [vmem:[%s2] sm:$0x1]
  %v24 = vperm.slane %v22, 0
  %vm26 = vcmask 261120
  %v28 = vsel %vm26, %v17, 0
  %30 = vmatpush.msra.mxu0 0.0
  %31 = vmatpush.msra.mxu0 0.0
  %32 = vmatpush.msra.mxu0 0.0
  %33 = vmatpush.msra.mxu0 0.0
  %34 = vmatpush.msra.mxu0 0.0
  %35 = vmatpush.msra.mxu0 0.0
  %36 = vmatpush.msra.mxu0 0.0
  %37 = vmatpush.msra.mxu0 0.0
  %38 = vmatpush.msra.mxu0 0.0
  %39 = vmatpush.msra.mxu0 0.0
  %40 = vmatpush.msra.mxu0 0.0
  %41 = vmatpush.msra.mxu0 0.0
  %42 = vmatpush.msra.mxu0 %v21
  %43 = vmatpush.msra.mxu0 %v20
  %44 = vmatpush.msra.mxu0 %v19
  %45 = vmatpush.msra.mxu0 %v18
  %46 = vmatmul.f32.gmra.mxu0 %v28
  %v47 = vpop.f32.mrf.mxu0
  %v48 = vadd.f32 %v24, %v47
  %49 = vdwg.mxu0
  %v50 = vmax.f32 %v48, 0.0
  %v51 = vld [vmem:[%s3] sm:$0xff]
  %v52 = vld [vmem:[%s3 + $0x8] sm:$0xff]
  %v53 = vld [vmem:[%s3 + $0x10] sm:$0xff]
  %v54 = vld [vmem:[%s3 + $0x18] sm:$0xff]
  %v55 = vld [vmem:[%s3 + $0x20] sm:$0xff]
  %v56 = vld [vmem:[%s3 + $0x28] sm:$0xff]
  %v57 = vld [vmem:[%s3 + $0x30] sm:$0xff]
  %v58 = vld [vmem:[%s3 + $0x38] sm:$0xff]
  %v59 = vld [vmem:[%s3 + $0x40] sm:$0xff]
  %v60 = vld [vmem:[%s3 + $0x48] sm:$0xff]
  %v61 = vld [vmem:[%s3 + $0x50] sm:$0xff]
  %v62 = vld [vmem:[%s3 + $0x58] sm:$0xff]
  %v63 = vld [vmem:[%s3 + $0x60] sm:$0xff]
  %v64 = vld [vmem:[%s3 + $0x68] sm:$0xff]
  %v65 = vld [vmem:[%s3 + $0x70] sm:$0xff]
  %v66 = vld [vmem:[%s3 + $0x78] sm:$0xff]
  %67 = vmatpush.msra.mxu0 %v66
  %68 = vmatpush.msra.mxu0 %v65
  %69 = vmatpush.msra.mxu0 %v64
  %70 = vmatpush.msra.mxu0 %v63
  %71 = vmatpush.msra.mxu0 %v62
  %72 = vmatpush.msra.mxu0 %v61
  %73 = vmatpush.msra.mxu0 %v60
  %74 = vmatpush.msra.mxu0 %v59
  %75 = vmatpush.msra.mxu0 %v58
  %76 = vmatpush.msra.mxu0 %v57
  %77 = vmatpush.msra.mxu0 %v56
  %78 = vmatpush.msra.mxu0 %v55
  %79 = vmatpush.msra.mxu0 %v54
  %80 = vmatpush.msra.mxu0 %v53
  %81 = vmatpush.msra.mxu0 %v52
  %82 = vmatpush.msra.mxu0 %v51
  %83 = vmatmul.f32.gmra.mxu0 %v50
  %v84 = vpop.f32.mrf.mxu0
  %v85 = vadd.f32 0.0, %v84
  %86 = vdwg.mxu0
  %v87 = vmax.f32 %v85, -50.0
  %v88 = vmin.f32 %v87, 50.0
  %vm89 = vcmp.gt.f32.partialorder %v88, 20.0
  %v90 = vmin.f32 %v88, 20.0
  %v91 = vmul.f32 %v90, 1.442695
  %v92 = vpow.pop %v91
  %v93 = vadd.f32 %v92, 1.0
  %v94 = vlog2.pop %v93
  %v95 = vmul.f32 %v94, 0.6931472
  %v96 = vmul.f32 -0.5, %v92
  %v97 = vadd.f32 %v96, 1.0
  %v98 = vmul.f32 %v97, %v92
  %v99 = vand.u32 2147483647, %v92
  %vm100 = vcmp.lt.f32.partialorder %v99, 0.0004427343
  %v101 = vsel %vm100, %v98, %v95
  %v102 = vsel %vm89, %v88, %v101
  %vm103 = vcmask 15360
  %104 = vst.msk [vmem:[%s4] sm:$0xff] %vm103, %v102
  // Predicated region
  $region18: #{dre_model.1} parent=0 // pred_check
    _
  $region19: #{dre_model.1} parent=0 // pred_check_branch
    %106 = sbr.rel (0) target = $region21
  $region20: #{dre_model.1} parent=0 // pred_region
    _
  $region21: #{dre_model.1} parent=0 // pred_fallthru
    _
  // Predicated region
  $region22: #{dre_model.1} parent=0 // pred_check
    _
  $region23: #{dre_model.1} parent=0 // pred_check_branch
    %108 = sbr.rel (0) target = $region25
  $region24: #{dre_model.1} parent=0 // pred_region
    _
  $region25: #{dre_model.1} parent=0 // pred_fallthru
    _

</llo_original>
